<compile_context>
chip_gen: v6e
topology: v6e:2x2x1
jax: 0.10.0
libtpu: 0.0.40
codegen_flags: <defaults>
</compile_context>

<pallas_src>
import functools

import numpy as np
import jax
import jax.numpy as jnp
from jax.experimental import pallas as pl
from jax.experimental.pallas import tpu as pltpu


# ----------------------------------------------------------------------------
# Pallas kernel: one batch element x one query block.
# ----------------------------------------------------------------------------
def _hoi_cost_kernel(logits_ref, rhs_ref, bias_ref, out_ref):
    # logits_ref: [1, Qb, C]  bf16
    # rhs_ref:    [1, C, Tp]  bf16   (folded per-target scales, pre-transposed)
    # bias_ref:   [1, 1, Tp]  f32    (per-target additive term)
    # out_ref:    [1, Qb, Tp] f32    (lane-dense last dim)
    prob = jax.nn.sigmoid(logits_ref[...].astype(jnp.float32))          # f32 sigmoid (v5e-safe)
    raw = jnp.einsum(
        "bqc,bct->bqt", prob.astype(jnp.bfloat16), rhs_ref[...],
        preferred_element_type=jnp.float32)                              # single MXU contraction
    out_ref[...] = raw + bias_ref[...]                                   # broadcast add


def _choose_q_block(B, Q, min_steps=4):
    """Split Q only when the batch alone gives too few grid steps (v7x megacore /
    pipelining); blocks stay multiples of 8 sublanes and per-step overhead bounded."""
    if Q <= 8 or Q % 8 != 0 or B >= min_steps:
        return Q
    qb = Q
    while qb > 8 and B * pl.cdiv(Q, qb) < min_steps:
        qb -= 8
    return qb


@functools.lru_cache(maxsize=None)
def _build_hoi_cost_fn(B, Q, T, C, weight):
    """Builds (once per shape/weight) a jitted fn [B,Q,C],[B,T,C] -> [B,Q,Tp]."""
    Tp = max(128, ((T + 127) // 128) * 128)        # lane-dense target axis
    Qb = _choose_q_block(B, Q)
    nq = pl.cdiv(Q, Qb)
    grid = (B, nq)

    call = pl.pallas_call(
        _hoi_cost_kernel,
        out_shape=jax.ShapeDtypeStruct((B, Q, Tp), jnp.float32),
        grid_spec=pltpu.PrefetchScalarGridSpec(
            num_scalar_prefetch=0,
            grid=grid,
            in_specs=[
                pl.BlockSpec((1, Qb, C), lambda b, q: (b, q, 0)),
                pl.BlockSpec((1, C, Tp), lambda b, q: (b, 0, 0)),   # constant over q -> no re-DMA
                pl.BlockSpec((1, 1, Tp), lambda b, q: (b, 0, 0)),
            ],
            out_specs=pl.BlockSpec((1, Qb, Tp), lambda b, q: (b, q, 0)),
        ),
        compiler_params=pltpu.CompilerParams(
            dimension_semantics=("parallel", "parallel")),
    )

    k = float(-0.5 * weight * weight)   # weight applied twice in the reference module
    c_f = float(C)

    @jax.jit
    def fn(pred_hoi_logits, hoi_labels):
        lab = hoi_labels.astype(jnp.float32)                         # [B, T, C]
        s = jnp.sum(lab, axis=2)                                     # [B, T]
        a = 1.0 / (s + 1e-4)                                         # 1/(sum T + eps)
        b = 1.0 / (c_f - s + 1e-4)                                   # 1/(sum(1-T) + eps)
        # RHS'[t, c] = k*(a_t+b_t)*T[t,c] - k*b_t   (exact f32, cast to bf16 once)
        rhs = (k * (a + b))[:, :, None] * lab - (k * b)[:, :, None]  # [B, T, C]
        rhs = jnp.pad(rhs, ((0, 0), (0, Tp - T), (0, 0)))            # padded targets -> 0 cols
        rhs_t = jnp.transpose(rhs, (0, 2, 1)).astype(jnp.bfloat16)   # [B, C, Tp]
        bias = jnp.pad(k * b * (c_f - s), ((0, 0), (0, Tp - T)))     # [B, Tp]
        bias = bias[:, None, :]                                      # [B, 1, Tp]
        logits_bf16 = pred_hoi_logits.astype(jnp.bfloat16)           # halve dominant HBM read
        return call(logits_bf16, rhs_t, bias)                        # [B, Q, Tp]

    return fn


def compute_hoi_cost_padded(pred_hoi_logits, hoi_labels, cost_hoi_class=1.0):
    """[B,Q,C] logits, [B,T,C] labels -> padded [B,Q,Tp] f32 cost (slice on host)."""
    B, Q, C = pred_hoi_logits.shape
    _, T, _ = hoi_labels.shape
    fn = _build_hoi_cost_fn(int(B), int(Q), int(T), int(C), float(cost_hoi_class))
    return fn(pred_hoi_logits, hoi_labels)


def compute_hoi_cost(pred_hoi_logits, hoi_labels, cost_hoi_class=1.0):
    """Convenience wrapper returning the unpadded [B,Q,T] cost (device-side slice)."""
    T = hoi_labels.shape[1]
    return compute_hoi_cost_padded(pred_hoi_logits, hoi_labels, cost_hoi_class)[:, :, :T]


# Pure-JAX reference (mirrors the PyTorch math) for a numerical sanity check.
def _reference_cost_jax(pred_hoi_logits, hoi_labels, cost_hoi_class=1.0):
    prob = jax.nn.sigmoid(pred_hoi_logits.astype(jnp.float32))
    tgt = hoi_labels.astype(jnp.float32)
    pos_den = jnp.sum(tgt, axis=2) + 1e-4                      # [B, T]
    neg_den = jnp.sum(1.0 - tgt, axis=2) + 1e-4                # [B, T]
    pos = jnp.einsum("bqc,btc->bqt", prob, tgt) / pos_den[:, None, :]
    neg = jnp.einsum("bqc,btc->bqt", 1.0 - prob, 1.0 - tgt) / neg_den[:, None, :]
    w = float(cost_hoi_class)
    return (w * w) * (-(pos + neg) * 0.5)


# ----------------------------------------------------------------------------
# Host-side linear_sum_assignment (Hungarian, Jonker-Volgenant style).
# TODO(synk): sequential augmenting-path algorithm with no Pallas equivalent;
# done on host in NumPy.
# ----------------------------------------------------------------------------
def linear_sum_assignment_np(cost):
    cost = np.asarray(cost, dtype=np.float64)
    transposed = False
    if cost.shape[0] > cost.shape[1]:
        cost = cost.T
        transposed = True
    n, m = cost.shape  # n <= m
    INF = float("inf")
    u = np.zeros(n + 1)
    v = np.zeros(m + 1)
    p = np.zeros(m + 1, dtype=int)
    way = np.zeros(m + 1, dtype=int)
    for i in range(1, n + 1):
        p[0] = i
        j0 = 0
        minv = np.full(m + 1, INF)
        used = np.zeros(m + 1, dtype=bool)
        while True:
            used[j0] = True
            i0 = p[j0]
            delta = INF
            j1 = -1
            for j in range(1, m + 1):
                if not used[j]:
                    cur = cost[i0 - 1, j - 1] - u[i0] - v[j]
                    if cur < minv[j]:
                        minv[j] = cur
                        way[j] = j0
                    if minv[j] < delta:
                        delta = minv[j]
                        j1 = j
            for j in range(m + 1):
                if used[j]:
                    u[p[j]] += delta
                    v[j] -= delta
                else:
                    minv[j] -= delta
            j0 = j1
            if p[j0] == 0:
                break
        while j0 != 0:
            j1 = way[j0]
            p[j0] = p[j1]
            j0 = j1
    cols_for_row = np.zeros(n, dtype=int)
    for j in range(1, m + 1):
        if p[j] != 0:
            cols_for_row[p[j] - 1] = j - 1
    rows = np.arange(n)
    cols = cols_for_row
    if transposed:
        order = np.argsort(cols)
        return cols[order], rows[order]
    return rows, cols


# ----------------------------------------------------------------------------
# JAX/Pallas port of HungarianMatcherHOI
# ----------------------------------------------------------------------------
class HungarianMatcherHOI:
    def __init__(self, cost_obj_class=1.0, cost_verb_class=1.0, cost_bbox=1.0,
                 cost_giou=1.0, cost_hoi_class=1.0):
        self.cost_obj_class = cost_obj_class
        self.cost_verb_class = cost_verb_class
        self.cost_hoi_class = cost_hoi_class
        self.cost_bbox = cost_bbox
        self.cost_giou = cost_giou
        assert (cost_obj_class != 0 or cost_verb_class != 0 or cost_bbox != 0
                or cost_giou != 0), "all costs cant be 0"

    def __call__(self, outputs, targets):
        bs = len(outputs["pred_sub_boxes"])
        bs_hoi_indices = []
        if "pred_hoi_logits" in outputs:
            pred_hoi_logits = outputs["pred_hoi_logits"]                  # [B, Q, C]
            sizes = [int(targets[b]["hoi_labels"].shape[0]) for b in range(bs)]
            t_max = max(max(sizes), 1)
            padded = []
            for b in range(bs):
                lab = jnp.asarray(targets[b]["hoi_labels"], dtype=jnp.float32)
                if lab.shape[0] < t_max:
                    lab = jnp.pad(lab, ((0, t_max - lab.shape[0]), (0, 0)))
                padded.append(lab)
            hoi_labels = jnp.stack(padded, axis=0)                        # [B, Tmax, C]
            # Pallas kernel: full HOI classification cost, all batches at once.
            cost_pad = compute_hoi_cost_padded(pred_hoi_logits, hoi_labels,
                                               self.cost_hoi_class)       # [B, Q, Tp]
            cost_np = np.asarray(jax.block_until_ready(cost_pad))
            for b in range(bs):
                hoi_sizes = sizes[b]
                c = cost_np[b][:, :hoi_sizes]          # host-side unpad (trailing padding)
                bs_hoi_indices.append(linear_sum_assignment_np(c))
        return bs_hoi_indices


if __name__ == "__main__":
    key = jax.random.PRNGKey(0)
    B, Q, T, C = 2, 8, 4, 32

    k1, k2, k3 = jax.random.split(key, 3)
    pred_hoi_logits = jax.random.normal(k1, (B, Q, C), dtype=jnp.float32)
    pred_sub_boxes = jax.random.uniform(k2, (B, Q, 4), dtype=jnp.float32)

    # Deterministic multi-hot target HOI labels (ragged target counts per batch).
    label_bits = (jax.random.uniform(k3, (B, T, C)) < 0.15).astype(jnp.float32)
    targets = [{"hoi_labels": label_bits[0]},            # 4 targets
               {"hoi_labels": label_bits[1, :3]}]        # 3 targets (ragged)

    outputs = {"pred_hoi_logits": pred_hoi_logits,
               "pred_sub_boxes": pred_sub_boxes}

    matcher = HungarianMatcherHOI(cost_hoi_class=1.0)
    indices = matcher(outputs, targets)

    # Kernel output vs pure-JAX reference (bf16 MXU tolerance).
    cost = jax.block_until_ready(
        compute_hoi_cost(pred_hoi_logits, label_bits, 1.0))
    ref = jax.block_until_ready(
        _reference_cost_jax(pred_hoi_logits, label_bits, 1.0))
    np.testing.assert_allclose(np.asarray(cost), np.asarray(ref),
                               atol=5e-2, rtol=0.0)

    assert cost.shape == (B, Q, T)
    assert len(indices) == B
    for b, (r, c) in enumerate(indices):
        n_tgt = targets[b]["hoi_labels"].shape[0]
        assert len(r) == len(c) == min(Q, n_tgt)

    print("KERNEL_OK")
</pallas_src>

<mosaic_0001>
module attributes {stable_mosaic.version = 11 : i64} {
  func.func @_hoi_cost_kernel(%arg0: i32, %arg1: i32, %arg2: memref<1x8x32xbf16, #tpu.memory_space<vmem>>, %arg3: memref<1x32x128xbf16, #tpu.memory_space<vmem>>, %arg4: memref<1x1x128xf32, #tpu.memory_space<vmem>>, %arg5: memref<1x8x128xf32, #tpu.memory_space<vmem>>) attributes {dimension_semantics = [#tpu.dimension_semantics<parallel>, #tpu.dimension_semantics<parallel>], iteration_bounds = array<i64: 2, 1>, scalar_prefetch = 0 : i64, scratch_operands = 0 : i64, tpu.core_type = #tpu.core_type<tc>, window_params = [{transform_indices = @transform_0, window_bounds = array<i64: 1, 8, 32>}, {transform_indices = @transform_1, window_bounds = array<i64: 1, 32, 128>}, {transform_indices = @transform_2, window_bounds = array<i64: 1, 1, 128>}, {transform_indices = @transform_3, window_bounds = array<i64: 1, 8, 128>}]} {
    %c0 = arith.constant 0 : index
    %c0_0 = arith.constant 0 : index
    %c0_1 = arith.constant 0 : index
    %0 = vector.load %arg2[%c0, %c0_0, %c0_1] : memref<1x8x32xbf16, #tpu.memory_space<vmem>>, vector<1x8x32xbf16>
    %1 = arith.extf %0 : vector<1x8x32xbf16> to vector<1x8x32xf32>
    %2 = arith.negf %1 : vector<1x8x32xf32>
    %3 = math.exp %2 : vector<1x8x32xf32>
    %cst = arith.constant 1.000000e+00 : f32
    %4 = vector.broadcast %cst : f32 to vector<1x8x32xf32>
    %5 = arith.addf %4, %3 : vector<1x8x32xf32>
    %6 = arith.divf %4, %5 : vector<1x8x32xf32>
    %7 = arith.truncf %6 : vector<1x8x32xf32> to vector<1x8x32xbf16>
    %c0_2 = arith.constant 0 : index
    %c0_3 = arith.constant 0 : index
    %c0_4 = arith.constant 0 : index
    %8 = vector.load %arg3[%c0_2, %c0_3, %c0_4] : memref<1x32x128xbf16, #tpu.memory_space<vmem>>, vector<1x32x128xbf16>
    "tpu.trace_start"() <{level = 10 : i32, message = "bqc,bct->bqt"}> : () -> ()
    %cst_5 = arith.constant dense<0.000000e+00> : vector<1x8x128xf32>
    %9 = tpu.matmul %7, %8, %cst_5 {dimension_numbers = #tpu.dot_dimension_numbers<[2], [1], [1], [2], [0, 0, 0, 1, 1, 2], [0], [0]>} : vector<1x8x32xbf16>, vector<1x32x128xbf16>, vector<1x8x128xf32> -> vector<1x8x128xf32>
    "tpu.trace_stop"() : () -> ()
    %c0_6 = arith.constant 0 : index
    %c0_7 = arith.constant 0 : index
    %c0_8 = arith.constant 0 : index
    %10 = vector.load %arg4[%c0_6, %c0_7, %c0_8] : memref<1x1x128xf32, #tpu.memory_space<vmem>>, vector<1x1x128xf32>
    %11 = vector.broadcast %10 : vector<1x1x128xf32> to vector<1x8x128xf32>
    %12 = arith.addf %9, %11 : vector<1x8x128xf32>
    %c0_9 = arith.constant 0 : index
    %c0_10 = arith.constant 0 : index
    %c0_11 = arith.constant 0 : index
    %13 = vector.load %arg5[%c0_9, %c0_10, %c0_11] : memref<1x8x128xf32, #tpu.memory_space<vmem>>, vector<1x8x128xf32>
    tpu.vector_store %arg5[%c0_9, %c0_10, %c0_11], %12 {strides = array<i32>} : memref<1x8x128xf32, #tpu.memory_space<vmem>>, vector<1x8x128xf32>,
    return
  }
  func.func @transform_0(%arg0: i32, %arg1: i32) -> (i32, i32, i32) {
    %c0_i32 = arith.constant 0 : i32
    %c0_i32_0 = arith.constant 0 : i32
    return %arg0, %arg1, %c0_i32 : i32, i32, i32
  }
  func.func @transform_1(%arg0: i32, %arg1: i32) -> (i32, i32, i32) {
    %c0_i32 = arith.constant 0 : i32
    %c0_i32_0 = arith.constant 0 : i32
    %c0_i32_1 = arith.constant 0 : i32
    return %arg0, %c0_i32, %c0_i32_0 : i32, i32, i32
  }
  func.func @transform_2(%arg0: i32, %arg1: i32) -> (i32, i32, i32) {
    %c0_i32 = arith.constant 0 : i32
    %c0_i32_0 = arith.constant 0 : i32
    %c0_i32_1 = arith.constant 0 : i32
    return %arg0, %c0_i32, %c0_i32_0 : i32, i32, i32
  }
  func.func @transform_3(%arg0: i32, %arg1: i32) -> (i32, i32, i32) {
    %c0_i32 = arith.constant 0 : i32
    %c0_i32_0 = arith.constant 0 : i32
    return %arg0, %arg1, %c0_i32 : i32, i32, i32
  }
}

</mosaic_0001>

<llo_original>
// kernel: fn.1
$region0: #{fn.1}
  #allocation0 [shape = 'u32[]', space=smem, size = 0x4, offset = 0x4, fixed_abs, tag = 'smem constant byte address 0x4 - core index']
  #allocation1 [shape = 'u32[144,128]{1,0:T(1,128)}', space=vmem, size = 0x12000, scoped, tag = 'internal scratch']
  %s0 = inlined_call_operand.vmem [shape: bf16[2,8,32], index: 0, kind: input, shape index: {}]
  %s1 = inlined_call_operand.vmem [shape: bf16[2,32,128], index: 1, kind: input, shape index: {}]
  %s2 = inlined_call_operand.vmem [shape: f32[2,1,128], index: 2, kind: input, shape index: {}]
  %s3 = inlined_call_operand.hbm [shape: f32[2,8,128], index: 3, kind: output, shape index: {}]
  %s4 = sld [smem:[#allocation0]]
  $region45: #{fn.1} parent=0
    _
  %s6 = ssub.s32 1, %s4
  %s7 = scalar_select 0, %s6, %s4
  $region1: #{fn.1} parent=0
    #allocation2 [shape = 'u8[8192]{0}', space=vmem, size = 0x2000, scoped, tag = 'output window, operand 0']
    #allocation3 [shape = 's32[2]{0}', space=sflag, size = 0x8, scoped, tag = 'scoped memory for fn.1']
    %8 = vsyncpa [#allocation3], 0
    %s9 = scalar_lea.sflag [#allocation3], 1
    %10 = vsyncpa %s9, 0
    loop: start=0, step=1, limit=4
    $region2: #{fn.1} parent=1 // loop_pre_header
      _
    $region3: #{fn.1} parent=1 // loop_header
      %s12 = sphi 0, %s16
      %p13 = scmp.ge.s32.totalorder %s12, 4
      %s19 = sphi 0, %s31
      %s20 = sphi 0, %s27
      %s21 = sphi 0, %s19
      %s22 = sphi 0, %s20
      %s23 = sphi 0, %s21
      %s24 = sphi 0, %s22
      %s36 = sphi 0, %s38
      %s39 = sphi 0, %s36
      %s40 = sphi 0, %s39
      %s56 = sphi 0, %s40
      %s62 = sphi 0, %s64
      %s65 = sphi 0, %s62
      %s66 = sphi 0, %s65
      %s82 = sphi 0, %s66
      %s88 = sphi 0, %s90
      %s91 = sphi 0, %s88
      %s92 = sphi 0, %s91
      %s108 = sphi 0, %s92
      %s116 = sphi 0, %s118
      %s119 = sphi 0, %s116
      %s120 = sphi 0, %s119
      %s136 = sphi 0, %s120
    $region4: #{fn.1} parent=1 // loop_header_branch
      %15 = sbr.rel (%p13) target = $region8
    $region5: #{fn.1} parent=1 // loop_body
      %s17 = ssub.s32 %s12, 1
      %s18 = ssub.s32 %s12, 2
      %s25 = sadd.s32 1, %s20
      %p26 = scmp.ge.s32.totalorder %s25, 1
      %s27 = scalar_select %p26, 0, %s25
      %s28 = sadd.s32 1, %s19
      %s29 = scalar_select %p26, %s28, %s19
      %p30 = scmp.ge.s32.totalorder %s29, 2
      %s31 = scalar_select %p30, 0, %s29
      %s32 = ssub.s32 %s19, %s31
      %s33 = ssub.s32 %s20, %s27
      %s34 = sor.u32 %s32, %s33
      %p35 = scmp.eq.s32.totalorder %s34, 0
      %s37 = sadd.s32 %s36, 1
      %s38 = scalar_select %p35, %s36, %s37
      %p41 = pneg %p35
      %p42 = scmp.eq.s32.totalorder %s12, 1
      %p43 = por %p41, %p42
      %p44 = scmp.ne.s32.totalorder %s36, %s39
      %p45 = scmp.eq.s32.totalorder %s12, 0
      %p46 = por %p44, %p45
      %p47 = scmp.ne.s32.totalorder %s36, %s39
      %p48 = scmp.eq.s32.totalorder %s17, 1
      %p49 = por %p47, %p48
      %p50 = scmp.ne.s32.totalorder %s39, %s40
      %p51 = scmp.eq.s32.totalorder %s17, 0
      %p52 = por %p50, %p51
      %p53 = scmp.ne.s32.totalorder %s39, %s40
      %p54 = scmp.eq.s32.totalorder %s18, 1
      %p55 = por %p53, %p54
      %p57 = scmp.ne.s32.totalorder %s40, %s56
      %p58 = scmp.eq.s32.totalorder %s18, 0
      %p59 = por %p57, %p58
      %s60 = ssub.s32 %s19, %s31
      %p61 = scmp.eq.s32.totalorder %s60, 0
      %s63 = sadd.s32 %s62, 1
      %s64 = scalar_select %p61, %s62, %s63
      %p67 = pneg %p61
      %p68 = scmp.eq.s32.totalorder %s12, 1
      %p69 = por %p67, %p68
      %p70 = scmp.ne.s32.totalorder %s62, %s65
      %p71 = scmp.eq.s32.totalorder %s12, 0
      %p72 = por %p70, %p71
      %p73 = scmp.ne.s32.totalorder %s62, %s65
      %p74 = scmp.eq.s32.totalorder %s17, 1
      %p75 = por %p73, %p74
      %p76 = scmp.ne.s32.totalorder %s65, %s66
      %p77 = scmp.eq.s32.totalorder %s17, 0
      %p78 = por %p76, %p77
      %p79 = scmp.ne.s32.totalorder %s65, %s66
      %p80 = scmp.eq.s32.totalorder %s18, 1
      %p81 = por %p79, %p80
      %p83 = scmp.ne.s32.totalorder %s66, %s82
      %p84 = scmp.eq.s32.totalorder %s18, 0
      %p85 = por %p83, %p84
      %s86 = ssub.s32 %s19, %s31
      %p87 = scmp.eq.s32.totalorder %s86, 0
      %s89 = sadd.s32 %s88, 1
      %s90 = scalar_select %p87, %s88, %s89
      %p93 = pneg %p87
      %p94 = scmp.eq.s32.totalorder %s12, 1
      %p95 = por %p93, %p94
      %p96 = scmp.ne.s32.totalorder %s88, %s91
      %p97 = scmp.eq.s32.totalorder %s12, 0
      %p98 = por %p96, %p97
      %p99 = scmp.ne.s32.totalorder %s88, %s91
      %p100 = scmp.eq.s32.totalorder %s17, 1
      %p101 = por %p99, %p100
      %p102 = scmp.ne.s32.totalorder %s91, %s92
      %p103 = scmp.eq.s32.totalorder %s17, 0
      %p104 = por %p102, %p103
      %p105 = scmp.ne.s32.totalorder %s91, %s92
      %p106 = scmp.eq.s32.totalorder %s18, 1
      %p107 = por %p105, %p106
      %p109 = scmp.ne.s32.totalorder %s92, %s108
      %p110 = scmp.eq.s32.totalorder %s18, 0
      %p111 = por %p109, %p110
      %s112 = ssub.s32 %s19, %s31
      %s113 = ssub.s32 %s20, %s27
      %s114 = sor.u32 %s112, %s113
      %p115 = scmp.eq.s32.totalorder %s114, 0
      %s117 = sadd.s32 %s116, 1
      %s118 = scalar_select %p115, %s116, %s117
      %p121 = pneg %p115
      %p122 = scmp.eq.s32.totalorder %s12, 1
      %p123 = por %p121, %p122
      %p124 = scmp.ne.s32.totalorder %s116, %s119
      %p125 = scmp.eq.s32.totalorder %s12, 0
      %p126 = por %p124, %p125
      %p127 = scmp.ne.s32.totalorder %s116, %s119
      %p128 = scmp.eq.s32.totalorder %s17, 1
      %p129 = por %p127, %p128
      %p130 = scmp.ne.s32.totalorder %s119, %s120
      %p131 = scmp.eq.s32.totalorder %s17, 0
      %p132 = por %p130, %p131
      %p133 = scmp.ne.s32.totalorder %s119, %s120
      %p134 = scmp.eq.s32.totalorder %s18, 1
      %p135 = por %p133, %p134
      %p137 = scmp.ne.s32.totalorder %s120, %s136
      %p138 = scmp.eq.s32.totalorder %s18, 0
      %p139 = por %p137, %p138
      %p140 = scmp.le.s32.totalorder 1, %s12
      %p141 = scmp.lt.s32.totalorder %s12, 3
      %p142 = pnand %p140, %p141
      %p143 = pneg %p142
      // Predicated region
      $region9: #{fn.1} parent=5 // pred_check
        _
      $region10: #{fn.1} parent=5 // pred_check_branch
        %145 = sbr.rel (%p142) target = $region12
      $region11: #{fn.1} parent=5 // pred_region
        %s146 = ssub.s32 %s12, 1
      $region12: #{fn.1} parent=5 // pred_fallthru
        _
      %p147 = scmp.lt.s32.totalorder %s12, 2
      // Predicated region
      $region13: #{fn.1} parent=5 // pred_check
        %p148 = pneg %p147
      $region14: #{fn.1} parent=5 // pred_check_branch
        %150 = sbr.rel (%p148) target = $region16
      $region15: #{fn.1} parent=5 // pred_region
        // Predicated region
        $region17: #{fn.1} parent=15 // pred_check
          %p151 = pneg %p46
        $region18: #{fn.1} parent=15 // pred_check_branch
          %153 = sbr.rel (%p151) target = $region20
        $region19: #{fn.1} parent=15 // pred_region
          %p154 = scmp.lt.s32.totalorder %s19, 1
          %s155 = scalar_select %p154, %s19, 1
          %p156 = scmp.lt.s32.totalorder %s20, 0
          %s157 = scalar_select %p156, %s20, 0
          %s158 = sadd.s32 %s157, %s155
          %s159 = smul.addr %s158, 4
          %s160 = scalar_lea.vmem %s0, %s159
        $region20: #{fn.1} parent=15 // pred_fallthru
          _
        // Predicated region
        $region21: #{fn.1} parent=15 // pred_check
          %p161 = pneg %p72
        $region22: #{fn.1} parent=15 // pred_check_branch
          %163 = sbr.rel (%p161) target = $region24
        $region23: #{fn.1} parent=15 // pred_region
          %p164 = scmp.lt.s32.totalorder %s19, 1
          %s165 = scalar_select %p164, %s19, 1
          %s166 = smul.addr %s165, 4
          %s167 = smul.addr %s166, 4
          %s168 = scalar_lea.vmem %s1, %s167
        $region24: #{fn.1} parent=15 // pred_fallthru
          _
        // Predicated region
        $region25: #{fn.1} parent=15 // pred_check
          %p169 = pneg %p98
        $region26: #{fn.1} parent=15 // pred_check_branch
          %171 = sbr.rel (%p169) target = $region28
        $region27: #{fn.1} parent=15 // pred_region
          %p172 = scmp.lt.s32.totalorder %s19, 1
          %s173 = scalar_select %p172, %s19, 1
          %s174 = scalar_lea.vmem %s2, %s173
        $region28: #{fn.1} parent=15 // pred_fallthru
          _
      $region16: #{fn.1} parent=5 // pred_fallthru
        _
      %p175 = scmp.le.s32.totalorder 1, %s12
      %p176 = scmp.lt.s32.totalorder %s12, 3
      %p177 = pnand %p175, %p176
      %p178 = pneg %p177
      // Predicated region
      $region29: #{fn.1} parent=5 // pred_check
        _
      $region30: #{fn.1} parent=5 // pred_check_branch
        %180 = sbr.rel (%p177) target = $region32
      $region31: #{fn.1} parent=5 // pred_region
        %s181 = ssub.s32 %s12, 1
        %p182 = scmp.lt.s32.totalorder %s21, 1
        %s183 = scalar_select %p182, %s21, 1
        %p184 = scmp.lt.s32.totalorder %s22, 0
        %s185 = scalar_select %p184, %s22, 0
        %s186 = sadd.s32 %s185, %s183
        %s187 = smul.addr %s186, 4
        %s188 = scalar_lea.vmem %s0, %s187
        %p189 = pneg %p52
        %p190 = pneg %p49
        %p191 = scmp.lt.s32.totalorder %s21, 1
        %s192 = scalar_select %p191, %s21, 1
        %s193 = smul.addr %s192, 4
        %s194 = smul.addr %s193, 4
        %s195 = scalar_lea.vmem %s1, %s194
        %p196 = pneg %p78
        %p197 = pneg %p75
        %p198 = scmp.lt.s32.totalorder %s21, 1
        %s199 = scalar_select %p198, %s21, 1
        %s200 = scalar_lea.vmem %s2, %s199
        %p201 = pneg %p104
        %p202 = pneg %p101
        %p203 = pneg %p132
        %p204 = pneg %p129
        %s205 = sand.u32 %s119, 1
        %s206 = scalar_lea.sflag [#allocation3], %s205
        %s207 = sand.u32 %s119, 1
        %s208 = smul.addr %s207, 8
        %s209 = scalar_lea.vmem [#allocation2], %s208
        %p210 = scmp.lt.s32.totalorder %s21, 1
        %s211 = scalar_select %p210, %s21, 1
        %p212 = scmp.lt.s32.totalorder %s22, 0
        %s213 = scalar_select %p212, %s22, 0
        %s214 = sadd.s32 %s213, %s211
        %s215 = smul.addr %s214, 4
        %s216 = scalar_lea.vmem %s0, %s215
        %p217 = scmp.lt.s32.totalorder %s21, 1
        %s218 = scalar_select %p217, %s21, 1
        %s219 = smul.addr %s218, 4
        %s220 = smul.addr %s219, 4
        %s221 = scalar_lea.vmem %s1, %s220
        %p222 = scmp.lt.s32.totalorder %s21, 1
        %s223 = scalar_select %p222, %s21, 1
        %s224 = scalar_lea.vmem %s2, %s223
        %v226 = vld [vmem:[%s216] sm:$0xf]
        %v227 = vunpack.c.l.bf16 %v226
        %v228 = vxor.u32 %v227, 2147483648
        %v229 = vmul.f32 %v228, 1.442695
        %v230 = vpow.pop %v229
        %v231 = vadd.f32 %v230, 1.0
        %v232 = vrcp.pop %v231
        %v233 = vmul.f32 1.0, %v232
        %v234 = vpack.c.bf16 %v233, %v233
        %v235 = vld [vmem:[%s221] sm:$0xf]
        %v236 = vld [vmem:[%s221 + $0x4] sm:$0xf]
        %v237 = vld [vmem:[%s221 + $0x8] sm:$0xf]
        %v238 = vld [vmem:[%s221 + $0xc] sm:$0xf]
        %v239 = vld [vmem:[%s224] sm:$0x1]
        %v241 = vlaneseq
        %v242 = vshrl.u32 %v241, 7
        %v243 = vsub.s32 0, %v242
        %v244 = vrot.slane %v239, %v243
        %v250 = vunpack.c.l.b16 %v235
        %v251 = vunpack.c.l.b16 %v236
        %v252 = vunpack.c.l.b16 %v237
        %v253 = vunpack.c.l.b16 %v238
        %v254 = vpack.c.b16 %v251, %v250
        %v255 = vpack.c.b16 %v253, %v252
        %vm258 = vcmask 261120
        %v260 = vsel %vm258, %v234, 0
        %262 = vmatprep.subr.bf16.mxu0 0
        %263 = vmatpush1.bf16.msra.mxu0 0
        %264 = vmatprep.subr.bf16.mxu0 0
        %265 = vmatpush1.bf16.msra.mxu0 0
        %266 = vmatprep.subr.bf16.mxu0 0
        %267 = vmatpush1.bf16.msra.mxu0 0
        %268 = vmatprep.subr.bf16.mxu0 0
        %269 = vmatpush1.bf16.msra.mxu0 0
        %270 = vmatprep.subr.bf16.mxu0 0
        %271 = vmatpush1.bf16.msra.mxu0 0
        %272 = vmatprep.subr.bf16.mxu0 0
        %273 = vmatpush1.bf16.msra.mxu0 0
        %274 = vmatprep.subr.bf16.mxu0 0
        %275 = vmatpush1.bf16.msra.mxu0 %v255
        %276 = vmatprep.subr.bf16.mxu0 0
        %277 = vmatpush1.bf16.msra.mxu0 %v254
        %278 = vmatprep.subr.bf16.mxu0 0
        %279 = vmatpush2.bf16.msra.mxu0 0
        %280 = vmatprep.subr.bf16.mxu0 0
        %281 = vmatpush2.bf16.msra.mxu0 0
        %282 = vmatprep.subr.bf16.mxu0 0
        %283 = vmatpush2.bf16.msra.mxu0 0
        %284 = vmatprep.subr.bf16.mxu0 0
        %285 = vmatpush2.bf16.msra.mxu0 0
        %286 = vmatprep.subr.bf16.mxu0 0
        %287 = vmatpush2.bf16.msra.mxu0 0
        %288 = vmatprep.subr.bf16.mxu0 0
        %289 = vmatpush2.bf16.msra.mxu0 0
        %290 = vmatprep.subr.bf16.mxu0 0
        %291 = vmatpush2.bf16.msra.mxu0 0
        %292 = vmatprep.subr.bf16.mxu0 0
        %293 = vmatpush2.bf16.msra.mxu0 0
        %294 = vmatprep.mubr.bf16.mxu0 0
        %295 = vmatmul.mubr.bf16.gmra.mxu0 %v260
        %v296 = vpop.f32.mrf.mxu0
        %v297 = vadd.f32 %v244, %v296
        %v298 = vpop.f32.mrf.mxu0
        %v299 = vpop.f32.mrf.mxu0
        %v300 = vpop.f32.mrf.mxu0
        %301 = vdwg.mxu0
        %302 = vst [vmem:[%s209] sm:$0xff] %v297
        %s303 = sand.u32 %s119, 1
        %s304 = scalar_lea.sflag [#allocation3], %s303
        %s305 = sand.u32 %s119, 1
        %s306 = smul.addr %s305, 8
        %s307 = scalar_lea.vmem [#allocation2], %s306
        // Predicated region
        $region33: #{fn.1} parent=31 // pred_check
          %p308 = pneg %p129
        $region34: #{fn.1} parent=31 // pred_check_branch
          %310 = sbr.rel (%p308) target = $region36
        $region35: #{fn.1} parent=31 // pred_region
          %s312 = ssub.s32 128, 128
          %313 = vsyncadd %s304, %s312
          %s314 = sadd.s32 %s22, %s21
          %s315 = smul.addr %s314, 128
          %s316 = scalar_lea.hbm %s3, %s315
          %s318 = sshll.u32 %s307, 4
          %s319 = int_to_ptr.vmem [resolvable:$true] %s318
          %321 = dma.vmem_to_hbm [thread:$0]  %s319, 128, %s316, %s304
        $region36: #{fn.1} parent=31 // pred_fallthru
          _
      $region32: #{fn.1} parent=5 // pred_fallthru
        _
      %p322 = scmp.le.s32.totalorder 2, %s12
      // Predicated region
      $region37: #{fn.1} parent=5 // pred_check
        %p323 = pneg %p322
      $region38: #{fn.1} parent=5 // pred_check_branch
        %325 = sbr.rel (%p323) target = $region40
      $region39: #{fn.1} parent=5 // pred_region
        %s326 = ssub.s32 %s12, 2
        // Predicated region
        $region41: #{fn.1} parent=39 // pred_check
          %p327 = pneg %p135
        $region42: #{fn.1} parent=39 // pred_check_branch
          %329 = sbr.rel (%p327) target = $region44
        $region43: #{fn.1} parent=39 // pred_region
          %s330 = sand.u32 %s120, 1
          %s331 = scalar_lea.sflag [#allocation3], %s330
          %s332 = sand.u32 %s120, 1
          %s333 = smul.addr %s332, 8
          %s334 = scalar_lea.vmem [#allocation2], %s333
          %335 = dma.done %s331, 128
        $region44: #{fn.1} parent=39 // pred_fallthru
          _
      $region40: #{fn.1} parent=5 // pred_fallthru
        _
    $region6: #{fn.1} parent=1 // loop_footer
      %s16 = sadd.s32 1, %s12
    $region7: #{fn.1} parent=1 // loop_footer_branch
      %11 = sbr.rel target = $region3
    $region8: #{fn.1} parent=1 // loop_exit
      _
    %336 = vsyncpa [#allocation3], 1
    %s337 = scalar_lea.sflag [#allocation3], 1
    %338 = vsyncpa %s337, 1

</llo_original>
